<compile_context>
chip_gen: v7x
topology: tpu7x:2x2x1
jax: 0.10.0
libtpu: 0.0.40
codegen_flags: <defaults>
</compile_context>

<pallas_src>
import math

import jax
import jax.numpy as jnp
from jax.experimental import pallas as pl
from jax.experimental.pallas import tpu as pltpu


_MIB = 1024 * 1024
_H_STEP_TARGET_BYTES = 4 * _MIB   # aim for <= ~4 MiB output block per step
_H_MIN_BLOCK_BYTES = 1 * _MIB     # never shrink a step below ~1 MiB
_MIN_PARALLEL_STEPS = 4           # >=2 feeds both v7x TCs, >=4 balances them
# TODO(synk): gate _MIN_PARALLEL_STEPS on chip generation (1 TC on v5e/v6e,
# 2 TCs on v7x); on single-TC chips extra steps only shrink the DMAs.


def _get_pad(size: int, multiple: int):
    new_size = math.ceil(size / multiple) * multiple
    pad_size = new_size - size
    pad_left = pad_size // 2
    pad_right = pad_size - pad_left
    return pad_left, pad_right


def _sublane(itemsize: int) -> int:
    # Second-minor tile extent: 8 for 4-byte dtypes, 16 for bf16, 32 for int8/fp8.
    return 8 * max(1, 4 // itemsize)


def _ceil_to(x: int, m: int) -> int:
    return ((x + m - 1) // m) * m


def _tile_bytes(shape, itemsize: int) -> int:
    """Real VMEM footprint of a block: last dim padded to 128 lanes,
    second-to-last padded to the dtype sublane tile; leading dims multiply."""
    *lead, s2, s1 = shape
    n = math.prod(lead) * _ceil_to(s2, _sublane(itemsize)) * _ceil_to(s1, 128)
    return n * itemsize


def _vmem_budget_and_limit():
    """(block budget incl. double buffering, explicit vmem_limit_bytes)."""
    try:
        cap = pltpu.get_tpu_info().vmem_capacity_bytes
    except Exception:  # CPU tracing / interpret mode / older runtimes
        cap = 64 * _MIB
    limit = min(cap // 2, 32 * _MIB)      # 32 MiB on v5e/v6e/v7x, safe everywhere
    budget = (3 * limit) // 4             # leave ~25% headroom for the pipeline
    return budget, limit


def _pick_c_block(n, c, h, w, h_pad, w_pad, itemsize, budget):
    """Largest divisor of C whose double-buffered (in + out) block fits budget."""
    per_c = _tile_bytes((1, h, w), itemsize) + _tile_bytes((1, h_pad, w_pad), itemsize)
    c_max = max(1, budget // (2 * per_c))  # x2 for default double buffering
    for d in range(min(c, c_max), 0, -1):
        if c % d == 0:
            return d
    return 1


def _pick_h_tiles(h, h_pad, pad_top, pad_bot, w_pad, c_blk, n_steps, itemsize):
    """Number of tiles (>=1) along the padded output rows (H_pad)."""
    sub = _sublane(itemsize)

    def ok(n_h):
        if h_pad % n_h:
            return False
        hb = h_pad // n_h
        return (hb % sub == 0 and hb > pad_top and hb > pad_bot
                and hb - pad_top <= h and hb - pad_bot <= h)

    def out_bytes(n_h):
        return c_blk * _tile_bytes((1, h_pad // n_h, w_pad), itemsize)

    valid = [d for d in range(2, h_pad + 1) if ok(d)]
    if not valid:
        return 1
    n_h = 1
    if out_bytes(1) > _H_STEP_TARGET_BYTES:
        for d in valid:  # smallest split that brings blocks under the target
            if out_bytes(d) < _H_MIN_BLOCK_BYTES:
                break
            n_h = d
            if out_bytes(d) <= _H_STEP_TARGET_BYTES:
                break
    if n_steps * n_h < _MIN_PARALLEL_STEPS:
        for d in valid:  # add parallel steps without shrinking below ~1 MiB
            if d >= n_h and n_steps * d >= _MIN_PARALLEL_STEPS and \
                    out_bytes(d) >= _H_MIN_BLOCK_BYTES:
                n_h = d
                break
    return n_h


# --------------------------------------------------------------------------
# Kernels
# --------------------------------------------------------------------------

def _make_nchw_kernel(c_blk, h, w, h_pad, w_pad,
                      pad_top, pad_bot, pad_left, pad_right, dtype):
    """One (n, c-block) step: x_ref (c_blk, h, w) -> o_ref (c_blk, h_pad, w_pad).

    Zero fill uses only full-width (lane-dense) row bands; the data-row band is
    overwritten by the input once, avoiding lane-masked thin column stores."""
    pad_w = bool(pad_left or pad_right)

    def kernel(x_ref, o_ref):
        if pad_top:
            o_ref[:, pl.ds(0, pad_top), :] = jnp.zeros((c_blk, pad_top, w_pad), dtype)
        if pad_bot:
            o_ref[:, pl.ds(pad_top + h, pad_bot), :] = jnp.zeros((c_blk, pad_bot, w_pad), dtype)
        if pad_w:
            o_ref[:, pl.ds(pad_top, h), :] = jnp.zeros((c_blk, h, w_pad), dtype)
        o_ref[:, pl.ds(pad_top, h), pl.ds(pad_left, w)] = x_ref[...]

    return kernel


def _make_nchw_h_blocked_kernel(c_blk, h, w, w_pad, h_blk, n_h,
                                pad_top, pad_bot, pad_left, pad_right, dtype):
    """One (n, c-block, h-tile) step.

    x_ref: (c_blk, h, w) — full H, resident across the inner h axis.
    o_ref: (c_blk, h_blk, w_pad) — tile k of the padded output rows.
    pad_top / pad_bot are only applied in the first / last tile."""
    pad_w = bool(pad_left or pad_right)

    def store_rows(x_ref, o_ref, local_start, in_start, nrows):
        if pad_w:  # full-width (lane-dense) zero band, interior overwrites centre
            o_ref[:, pl.ds(local_start, nrows), :] = jnp.zeros((c_blk, nrows, w_pad), dtype)
        o_ref[:, pl.ds(local_start, nrows), pl.ds(pad_left, w)] = \
            x_ref[:, pl.ds(in_start, nrows), :]

    def kernel(x_ref, o_ref):
        k = pl.program_id(2)

        @pl.when(k == 0)
        def _first_tile():
            if pad_top:
                o_ref[:, pl.ds(0, pad_top), :] = jnp.zeros((c_blk, pad_top, w_pad), dtype)
            store_rows(x_ref, o_ref, pad_top, 0, h_blk - pad_top)

        if n_h > 2:
            @pl.when(jnp.logical_and(k > 0, k < n_h - 1))
            def _middle_tile():
                store_rows(x_ref, o_ref, 0, k * h_blk - pad_top, h_blk)

        @pl.when(k == n_h - 1)
        def _last_tile():
            nrows = h_blk - pad_bot
            store_rows(x_ref, o_ref, 0, h - nrows, nrows)
            if pad_bot:
                o_ref[:, pl.ds(nrows, pad_bot), :] = jnp.zeros((c_blk, pad_bot, w_pad), dtype)

    return kernel


def _make_nhwc_kernel(h, w, h_pad, w_pad, c_blk,
                      pad_top, pad_bot, pad_left, pad_right, dtype):
    """One (n, c-lane-block) step: x_ref (h, w, c_blk) -> o_ref (h_pad, w_pad, c_blk).
    C sits on the 128-lane axis, so every store here is lane-dense."""

    def kernel(x_ref, o_ref):
        if pad_top:
            o_ref[pl.ds(0, pad_top), :, :] = jnp.zeros((pad_top, w_pad, c_blk), dtype)
        if pad_bot:
            o_ref[pl.ds(pad_top + h, pad_bot), :, :] = jnp.zeros((pad_bot, w_pad, c_blk), dtype)
        if pad_left:
            o_ref[pl.ds(pad_top, h), pl.ds(0, pad_left), :] = jnp.zeros((h, pad_left, c_blk), dtype)
        if pad_right:
            o_ref[pl.ds(pad_top, h), pl.ds(pad_left + w, pad_right), :] = \
                jnp.zeros((h, pad_right, c_blk), dtype)
        o_ref[pl.ds(pad_top, h), pl.ds(pad_left, w), :] = x_ref[...]

    return kernel


# --------------------------------------------------------------------------
# Wrappers
# --------------------------------------------------------------------------

def center_padding(x, multiple, *, h_tiles=None):
    """Pallas equivalent of CenterPadding(multiple)(x) for NCHW input.

    `h_tiles` (optional) overrides the heuristic tile count along the padded H
    dimension (must divide H_pad); mainly for testing / tuning.
    """
    if x.ndim != 4:
        # TODO(synk): the PyTorch module pads every dim except the first two for
        # arbitrary rank; only the 4-D NCHW case is implemented here.
        raise NotImplementedError("center_padding expects 4-D NCHW input")
    n, c, h, w = x.shape
    pad_left_w, pad_right_w = _get_pad(w, multiple)
    pad_top_h, pad_bot_h = _get_pad(h, multiple)
    h_pad = h + pad_top_h + pad_bot_h
    w_pad = w + pad_left_w + pad_right_w
    itemsize = x.dtype.itemsize
    sub = _sublane(itemsize)

    budget, vmem_limit = _vmem_budget_and_limit()
    c_blk = _pick_c_block(n, c, h, w, h_pad, w_pad, itemsize, budget)
    n_steps = n * (c // c_blk)

    if h_tiles is not None:
        n_h = int(h_tiles)
        if n_h > 1:
            hb = h_pad // n_h
            if (h_pad % n_h or hb % sub or hb <= pad_top_h or hb <= pad_bot_h
                    or hb - pad_top_h > h or hb - pad_bot_h > h):
                raise ValueError(f"invalid h_tiles={n_h} for H={h}, H_pad={h_pad}")
        else:
            n_h = 1
    else:
        n_h = _pick_h_tiles(h, h_pad, pad_top_h, pad_bot_h, w_pad, c_blk,
                            n_steps, itemsize)

    # Megacore: with a single grid step, shrink the C block to any divisor of C
    # that yields >= 2 steps (keeps v7x's second TensorCore busy; on 1-TC chips
    # this only changes DMA sizes).
    if n_steps * n_h < 2 and c_blk > 1:
        for d in range(c_blk - 1, 0, -1):
            if c % d == 0 and n * (c // d) >= 2:
                c_blk = d
                break

    out_shape = jax.ShapeDtypeStruct((n, c, h_pad, w_pad), x.dtype)
    cost = pl.CostEstimate(
        flops=0, transcendentals=0,
        bytes_accessed=(x.size + n * c * h_pad * w_pad) * itemsize)

    # NOTE: for sub-MiB blocks, pipeline_mode=pl.Buffered(3) on the specs can
    # hide DMA start/finish latency (single-digit-% win); left at the default
    # double buffering here to keep the lowering path conservative.
    if n_h > 1:
        h_blk = h_pad // n_h
        kernel = _make_nchw_h_blocked_kernel(
            c_blk, h, w, w_pad, h_blk, n_h,
            pad_top_h, pad_bot_h, pad_left_w, pad_right_w, x.dtype)
        grid_spec = pltpu.PrefetchScalarGridSpec(
            num_scalar_prefetch=0,
            grid=(n, c // c_blk, n_h),
            in_specs=[
                # Full (c_blk, H, W) block whose index ignores the h axis: the
                # input stays resident in VMEM across the inner h tiles.
                pl.BlockSpec((None, c_blk, h, w), lambda i, j, k: (i, j, 0, 0)),
            ],
            out_specs=pl.BlockSpec((None, c_blk, h_blk, w_pad),
                                   lambda i, j, k: (i, j, k, 0)),
        )
        dims = ("parallel", "parallel", "parallel")
    else:
        kernel = _make_nchw_kernel(
            c_blk, h, w, h_pad, w_pad,
            pad_top_h, pad_bot_h, pad_left_w, pad_right_w, x.dtype)
        grid_spec = pltpu.PrefetchScalarGridSpec(
            num_scalar_prefetch=0,
            grid=(n, c // c_blk),
            in_specs=[pl.BlockSpec((None, c_blk, h, w), lambda i, j: (i, j, 0, 0))],
            out_specs=pl.BlockSpec((None, c_blk, h_pad, w_pad),
                                   lambda i, j: (i, j, 0, 0)),
        )
        dims = ("parallel", "parallel")

    return pl.pallas_call(
        kernel,
        out_shape=out_shape,
        grid_spec=grid_spec,
        compiler_params=pltpu.CompilerParams(
            dimension_semantics=dims, vmem_limit_bytes=vmem_limit),
        cost_estimate=cost,
    )(x)


def _pick_c_lane_block(h, w, h_pad, w_pad, c, itemsize, budget):
    """Lane-axis C block for the NHWC kernel: a multiple of 128 dividing C (or
    all of C) whose double-buffered (in + out) block fits the budget."""
    def fits(cb):
        b = _tile_bytes((h, w, cb), itemsize) + _tile_bytes((h_pad, w_pad, cb), itemsize)
        return 2 * b <= budget
    if c % 128 == 0:
        for m in range(c // 128, 0, -1):
            cb = 128 * m
            if c % cb == 0 and fits(cb):
                return cb
        return 128
    return c


def center_padding_nhwc(x, multiple):
    """Channels-last variant: pads H and W of an (N, H, W, C) tensor.

    Same logical image padding as `center_padding`, but with C on the 128-lane
    axis every store is lane-dense even when W_pad < 128 (the typical ViT/DINO
    feature-map case).  Use when the producer/consumer already run in NHWC."""
    if x.ndim != 4:
        raise NotImplementedError("center_padding_nhwc expects 4-D NHWC input")
    n, h, w, c = x.shape
    pad_top_h, pad_bot_h = _get_pad(h, multiple)
    pad_left_w, pad_right_w = _get_pad(w, multiple)
    h_pad = h + pad_top_h + pad_bot_h
    w_pad = w + pad_left_w + pad_right_w
    itemsize = x.dtype.itemsize

    budget, vmem_limit = _vmem_budget_and_limit()
    c_blk = _pick_c_lane_block(h, w, h_pad, w_pad, c, itemsize, budget)
    # TODO(synk): also tile H (as in the NCHW path) when a single (H, W, c_blk)
    # image block does not fit VMEM.

    cost = pl.CostEstimate(
        flops=0, transcendentals=0,
        bytes_accessed=(x.size + n * h_pad * w_pad * c) * itemsize)
    kernel = _make_nhwc_kernel(h, w, h_pad, w_pad, c_blk,
                               pad_top_h, pad_bot_h, pad_left_w, pad_right_w, x.dtype)
    return pl.pallas_call(
        kernel,
        out_shape=jax.ShapeDtypeStruct((n, h_pad, w_pad, c), x.dtype),
        grid_spec=pltpu.PrefetchScalarGridSpec(
            num_scalar_prefetch=0,
            grid=(n, c // c_blk),
            in_specs=[pl.BlockSpec((None, h, w, c_blk), lambda i, j: (i, 0, 0, j))],
            out_specs=pl.BlockSpec((None, h_pad, w_pad, c_blk),
                                   lambda i, j: (i, 0, 0, j)),
        ),
        compiler_params=pltpu.CompilerParams(
            dimension_semantics=("parallel", "parallel"),
            vmem_limit_bytes=vmem_limit),
        cost_estimate=cost,
    )(x)


# --------------------------------------------------------------------------
# Self-test
# --------------------------------------------------------------------------

def _ref_pad_nchw(x, multiple):
    pl_w, pr_w = _get_pad(x.shape[3], multiple)
    pt_h, pb_h = _get_pad(x.shape[2], multiple)
    return jnp.pad(x, ((0, 0), (0, 0), (pt_h, pb_h), (pl_w, pr_w)))


def _ref_pad_nhwc(x, multiple):
    pt_h, pb_h = _get_pad(x.shape[1], multiple)
    pl_w, pr_w = _get_pad(x.shape[2], multiple)
    return jnp.pad(x, ((0, 0), (pt_h, pb_h), (pl_w, pr_w), (0, 0)))


if __name__ == "__main__":
    key = jax.random.PRNGKey(0)
    k1, k2, k3, k4, k5 = jax.random.split(key, 5)

    # 1) Main NCHW path (matches the PyTorch module), DINOv2-style multiple.
    multiple = 14
    x = jax.random.normal(k1, (2, 4, 16, 16), dtype=jnp.float32)
    out = jax.block_until_ready(center_padding(x, multiple))
    ref = _ref_pad_nchw(x, multiple)
    assert out.shape == ref.shape, (out.shape, ref.shape)
    assert jnp.array_equal(out, ref), "NCHW mismatch vs reference padding"

    # 2) No-pad path (dims already a multiple) — exact copy.
    x2 = jax.random.normal(k2, (1, 3, 28, 28), dtype=jnp.float32)
    out2 = jax.block_until_ready(center_padding(x2, multiple))
    assert out2.shape == x2.shape and jnp.array_equal(out2, x2)

    # 3) bf16 on the band kernel (exercises dtype-aware VMEM accounting).
    x3 = jax.random.normal(k3, (2, 4, 16, 16), dtype=jnp.float32).astype(jnp.bfloat16)
    out3 = jax.block_until_ready(center_padding(x3, multiple))
    assert jnp.array_equal(out3, _ref_pad_nchw(x3, multiple))

    # 4) Force the H-blocked path (first / middle / last tile logic).
    x4 = jax.random.normal(k4, (1, 1, 30, 16), dtype=jnp.float32)
    ref4 = _ref_pad_nchw(x4, 8)
    for tiles in (2, 4):
        out4 = jax.block_until_ready(center_padding(x4, 8, h_tiles=tiles))
        assert out4.shape == ref4.shape
        assert jnp.array_equal(out4, ref4), f"H-blocked mismatch (h_tiles={tiles})"

    # 5) Channels-last (lane-dense) variant.
    x5 = jax.random.normal(k5, (2, 9, 11, 256), dtype=jnp.float32)
    out5 = jax.block_until_ready(center_padding_nhwc(x5, 7))
    assert jnp.array_equal(out5, _ref_pad_nhwc(x5, 7))

    print("KERNEL_OK")
</pallas_src>

<mosaic_0001>
module attributes {stable_mosaic.version = 11 : i64} {
  func.func @kernel(%arg0: i32, %arg1: i32, %arg2: memref<1x4x16x16xf32, #tpu.memory_space<vmem>>, %arg3: memref<1x4x28x28xf32, #tpu.memory_space<vmem>>) attributes {dimension_semantics = [#tpu.dimension_semantics<parallel>, #tpu.dimension_semantics<parallel>], iteration_bounds = array<i64: 2, 1>, scalar_prefetch = 0 : i64, scratch_operands = 0 : i64, tpu.core_type = #tpu.core_type<tc>, window_params = [{transform_indices = @transform_0, window_bounds = array<i64: 1, 4, 16, 16>}, {transform_indices = @transform_1, window_bounds = array<i64: 1, 4, 28, 28>}]} {
    %cst = arith.constant 0.000000e+00 : f32
    %0 = vector.broadcast %cst : f32 to vector<4x6x28xf32>
    %c0 = arith.constant 0 : index
    %c0_0 = arith.constant 0 : index
    %c0_1 = arith.constant 0 : index
    %c0_2 = arith.constant 0 : index
    %1 = vector.load %arg3[%c0, %c0_0, %c0_1, %c0_2] : memref<1x4x28x28xf32, #tpu.memory_space<vmem>>, vector<1x4x6x28xf32>
    %2 = vector.shape_cast %1 : vector<1x4x6x28xf32> to vector<4x6x28xf32>
    %3 = vector.shape_cast %0 : vector<4x6x28xf32> to vector<1x4x6x28xf32>
    tpu.vector_store %arg3[%c0, %c0_0, %c0_1, %c0_2], %3 {strides = array<i32>} : memref<1x4x28x28xf32, #tpu.memory_space<vmem>>, vector<1x4x6x28xf32>,
    %cst_3 = arith.constant 0.000000e+00 : f32
    %4 = vector.broadcast %cst_3 : f32 to vector<4x6x28xf32>
    %c0_4 = arith.constant 0 : index
    %c0_5 = arith.constant 0 : index
    %c22 = arith.constant 22 : index
    %c0_6 = arith.constant 0 : index
    %5 = vector.load %arg3[%c0_4, %c0_5, %c22, %c0_6] : memref<1x4x28x28xf32, #tpu.memory_space<vmem>>, vector<1x4x6x28xf32>
    %6 = vector.shape_cast %5 : vector<1x4x6x28xf32> to vector<4x6x28xf32>
    %7 = vector.shape_cast %4 : vector<4x6x28xf32> to vector<1x4x6x28xf32>
    tpu.vector_store %arg3[%c0_4, %c0_5, %c22, %c0_6], %7 {strides = array<i32>} : memref<1x4x28x28xf32, #tpu.memory_space<vmem>>, vector<1x4x6x28xf32>,
    %cst_7 = arith.constant 0.000000e+00 : f32
    %8 = vector.broadcast %cst_7 : f32 to vector<4x16x28xf32>
    %c0_8 = arith.constant 0 : index
    %c0_9 = arith.constant 0 : index
    %c6 = arith.constant 6 : index
    %c0_10 = arith.constant 0 : index
    %9 = vector.load %arg3[%c0_8, %c0_9, %c6, %c0_10] : memref<1x4x28x28xf32, #tpu.memory_space<vmem>>, vector<1x4x16x28xf32>
    %10 = vector.shape_cast %9 : vector<1x4x16x28xf32> to vector<4x16x28xf32>
    %11 = vector.shape_cast %8 : vector<4x16x28xf32> to vector<1x4x16x28xf32>
    tpu.vector_store %arg3[%c0_8, %c0_9, %c6, %c0_10], %11 {strides = array<i32>} : memref<1x4x28x28xf32, #tpu.memory_space<vmem>>, vector<1x4x16x28xf32>,
    %c0_11 = arith.constant 0 : index
    %c0_12 = arith.constant 0 : index
    %c0_13 = arith.constant 0 : index
    %c0_14 = arith.constant 0 : index
    %12 = vector.load %arg2[%c0_11, %c0_12, %c0_13, %c0_14] : memref<1x4x16x16xf32, #tpu.memory_space<vmem>>, vector<1x4x16x16xf32>
    %13 = vector.shape_cast %12 : vector<1x4x16x16xf32> to vector<4x16x16xf32>
    %c0_15 = arith.constant 0 : index
    %c0_16 = arith.constant 0 : index
    %c6_17 = arith.constant 6 : index
    %c6_18 = arith.constant 6 : index
    %14 = vector.load %arg3[%c0_15, %c0_16, %c6_17, %c6_18] : memref<1x4x28x28xf32, #tpu.memory_space<vmem>>, vector<1x4x16x16xf32>
    %15 = vector.shape_cast %14 : vector<1x4x16x16xf32> to vector<4x16x16xf32>
    %16 = vector.shape_cast %13 : vector<4x16x16xf32> to vector<1x4x16x16xf32>
    tpu.vector_store %arg3[%c0_15, %c0_16, %c6_17, %c6_18], %16 {strides = array<i32>} : memref<1x4x28x28xf32, #tpu.memory_space<vmem>>, vector<1x4x16x16xf32>,
    return
  }
  func.func @transform_0(%arg0: i32, %arg1: i32) -> (i32, i32, i32, i32) {
    %c0_i32 = arith.constant 0 : i32
    %c0_i32_0 = arith.constant 0 : i32
    %c0_i32_1 = arith.constant 0 : i32
    return %arg0, %arg1, %c0_i32, %c0_i32_0 : i32, i32, i32, i32
  }
  func.func @transform_1(%arg0: i32, %arg1: i32) -> (i32, i32, i32, i32) {
    %c0_i32 = arith.constant 0 : i32
    %c0_i32_0 = arith.constant 0 : i32
    %c0_i32_1 = arith.constant 0 : i32
    return %arg0, %arg1, %c0_i32, %c0_i32_0 : i32, i32, i32, i32
  }
}

</mosaic_0001>

<llo_original>
// kernel: tpu_custom_call.1
$region0: #{tpu_custom_call.1}
  #allocation0 [shape = 'u32[]', space=smem, size = 0x4, offset = 0x4, fixed_abs, tag = 'smem constant byte address 0x4 - core index']
  #allocation1 [shape = 'u32[144,128]{1,0:T(1,128)}', space=vmem, size = 0x12000, scoped, tag = 'internal scratch']
  %s0 = inlined_call_operand.hbm [shape: f32[2,4,16,16], index: 0, kind: input, shape index: {}]
  %s1 = inlined_call_operand.vmem [shape: f32[2,4,28,28], index: 1, kind: output, shape index: {}]
  %s2 = sld [smem:[#allocation0]]
  $region41: #{tpu_custom_call.1} parent=0
    _
  %s4 = ssub.s32 1, %s2
  %s5 = scalar_select 0, %s4, %s2
  $region1: #{tpu_custom_call.1} parent=0
    #allocation2 [shape = 'u8[65536]{0}', space=vmem, size = 0x10000, scoped, tag = 'input window, operand 0']
    #allocation3 [shape = 's32[2]{0}', space=sflag, size = 0x8, scoped, tag = 'scoped memory for tpu_custom_call.1']
    %6 = vsyncpa [#allocation3], 0
    %s7 = scalar_lea.sflag [#allocation3], 1
    %8 = vsyncpa %s7, 0
    loop: start=0, step=1, limit=4
    $region2: #{tpu_custom_call.1} parent=1 // loop_pre_header
      _
    $region3: #{tpu_custom_call.1} parent=1 // loop_header
      %s10 = sphi 0, %s14
      %p11 = scmp.ge.s32.totalorder %s10, 4
      %s17 = sphi 0, %s29
      %s18 = sphi 0, %s25
      %s19 = sphi 0, %s17
      %s20 = sphi 0, %s18
      %s21 = sphi 0, %s19
      %s22 = sphi 0, %s20
      %s34 = sphi 0, %s36
      %s37 = sphi 0, %s34
      %s38 = sphi 0, %s37
      %s54 = sphi 0, %s38
      %s62 = sphi 0, %s64
      %s65 = sphi 0, %s62
      %s66 = sphi 0, %s65
      %s82 = sphi 0, %s66
    $region4: #{tpu_custom_call.1} parent=1 // loop_header_branch
      %13 = sbr.rel (%p11) target = $region8
    $region5: #{tpu_custom_call.1} parent=1 // loop_body
      %s15 = ssub.s32 %s10, 1
      %s16 = ssub.s32 %s10, 2
      %s23 = sadd.s32 1, %s18
      %p24 = scmp.ge.s32.totalorder %s23, 1
      %s25 = scalar_select %p24, 0, %s23
      %s26 = sadd.s32 1, %s17
      %s27 = scalar_select %p24, %s26, %s17
      %p28 = scmp.ge.s32.totalorder %s27, 2
      %s29 = scalar_select %p28, 0, %s27
      %s30 = ssub.s32 %s17, %s29
      %s31 = ssub.s32 %s18, %s25
      %s32 = sor.u32 %s30, %s31
      %p33 = scmp.eq.s32.totalorder %s32, 0
      %s35 = sadd.s32 %s34, 1
      %s36 = scalar_select %p33, %s34, %s35
      %p39 = pneg %p33
      %p40 = scmp.eq.s32.totalorder %s10, 1
      %p41 = por %p39, %p40
      %p42 = scmp.ne.s32.totalorder %s34, %s37
      %p43 = scmp.eq.s32.totalorder %s10, 0
      %p44 = por %p42, %p43
      %p45 = scmp.ne.s32.totalorder %s34, %s37
      %p46 = scmp.eq.s32.totalorder %s15, 1
      %p47 = por %p45, %p46
      %p48 = scmp.ne.s32.totalorder %s37, %s38
      %p49 = scmp.eq.s32.totalorder %s15, 0
      %p50 = por %p48, %p49
      %p51 = scmp.ne.s32.totalorder %s37, %s38
      %p52 = scmp.eq.s32.totalorder %s16, 1
      %p53 = por %p51, %p52
      %p55 = scmp.ne.s32.totalorder %s38, %s54
      %p56 = scmp.eq.s32.totalorder %s16, 0
      %p57 = por %p55, %p56
      %s58 = ssub.s32 %s17, %s29
      %s59 = ssub.s32 %s18, %s25
      %s60 = sor.u32 %s58, %s59
      %p61 = scmp.eq.s32.totalorder %s60, 0
      %s63 = sadd.s32 %s62, 1
      %s64 = scalar_select %p61, %s62, %s63
      %p67 = pneg %p61
      %p68 = scmp.eq.s32.totalorder %s10, 1
      %p69 = por %p67, %p68
      %p70 = scmp.ne.s32.totalorder %s62, %s65
      %p71 = scmp.eq.s32.totalorder %s10, 0
      %p72 = por %p70, %p71
      %p73 = scmp.ne.s32.totalorder %s62, %s65
      %p74 = scmp.eq.s32.totalorder %s15, 1
      %p75 = por %p73, %p74
      %p76 = scmp.ne.s32.totalorder %s65, %s66
      %p77 = scmp.eq.s32.totalorder %s15, 0
      %p78 = por %p76, %p77
      %p79 = scmp.ne.s32.totalorder %s65, %s66
      %p80 = scmp.eq.s32.totalorder %s16, 1
      %p81 = por %p79, %p80
      %p83 = scmp.ne.s32.totalorder %s66, %s82
      %p84 = scmp.eq.s32.totalorder %s16, 0
      %p85 = por %p83, %p84
      %p86 = scmp.le.s32.totalorder 1, %s10
      %p87 = scmp.lt.s32.totalorder %s10, 3
      %p88 = pnand %p86, %p87
      %p89 = pneg %p88
      // Predicated region
      $region9: #{tpu_custom_call.1} parent=5 // pred_check
        _
      $region10: #{tpu_custom_call.1} parent=5 // pred_check_branch
        %91 = sbr.rel (%p88) target = $region12
      $region11: #{tpu_custom_call.1} parent=5 // pred_region
        %s92 = ssub.s32 %s10, 1
      $region12: #{tpu_custom_call.1} parent=5 // pred_fallthru
        _
      %p93 = scmp.lt.s32.totalorder %s10, 2
      // Predicated region
      $region13: #{tpu_custom_call.1} parent=5 // pred_check
        %p94 = pneg %p93
      $region14: #{tpu_custom_call.1} parent=5 // pred_check_branch
        %96 = sbr.rel (%p94) target = $region16
      $region15: #{tpu_custom_call.1} parent=5 // pred_region
        // Predicated region
        $region17: #{tpu_custom_call.1} parent=15 // pred_check
          %p97 = pneg %p44
        $region18: #{tpu_custom_call.1} parent=15 // pred_check_branch
          %99 = sbr.rel (%p97) target = $region20
        $region19: #{tpu_custom_call.1} parent=15 // pred_region
          %s100 = sand.u32 %s34, 1
          %s101 = scalar_lea.sflag [#allocation3], %s100
          %s102 = sand.u32 %s34, 1
          %s103 = smul.addr %s102, 64
          %s104 = scalar_lea.vmem [#allocation2], %s103
          %s105 = smul.u32 4, %s18
          %s107 = ssub.s32 1024, 1024
          %108 = vsyncadd %s101, %s107
          %s109 = smul.addr %s105, 2
          %s110 = smul.addr %s17, 8
          %s111 = sadd.s32 %s109, %s110
          %s112 = smul.addr %s111, 128
          %s113 = scalar_lea.hbm %s0, %s112
          %s114 = sshll.u32 %s104, 4
          %s115 = int_to_ptr.vmem [resolvable:$true] %s114
          %120 = dma.hbm_to_vmem [thread:$0]  %s113, 1024, %s115, %s101, 128, 128, 8
        $region20: #{tpu_custom_call.1} parent=15 // pred_fallthru
          _
      $region16: #{tpu_custom_call.1} parent=5 // pred_fallthru
        _
      %p121 = scmp.le.s32.totalorder 1, %s10
      %p122 = scmp.lt.s32.totalorder %s10, 3
      %p123 = pnand %p121, %p122
      %p124 = pneg %p123
      // Predicated region
      $region21: #{tpu_custom_call.1} parent=5 // pred_check
        _
      $region22: #{tpu_custom_call.1} parent=5 // pred_check_branch
        %126 = sbr.rel (%p123) target = $region24
      $region23: #{tpu_custom_call.1} parent=5 // pred_region
        %s127 = ssub.s32 %s10, 1
        %s128 = sand.u32 %s37, 1
        %s129 = scalar_lea.sflag [#allocation3], %s128
        %s130 = sand.u32 %s37, 1
        %s131 = smul.addr %s130, 64
        %s132 = scalar_lea.vmem [#allocation2], %s131
        // Predicated region
        $region25: #{tpu_custom_call.1} parent=23 // pred_check
          %p133 = pneg %p50
        $region26: #{tpu_custom_call.1} parent=23 // pred_check_branch
          %135 = sbr.rel (%p133) target = $region28
        $region27: #{tpu_custom_call.1} parent=23 // pred_region
          %136 = dma.done %s129, 1024
        $region28: #{tpu_custom_call.1} parent=23 // pred_fallthru
          _
        %s137 = sand.u32 %s37, 1
        %s138 = scalar_lea.sflag [#allocation3], %s137
        %s139 = sand.u32 %s37, 1
        %s140 = smul.addr %s139, 64
        %s141 = scalar_lea.vmem [#allocation2], %s140
        %p142 = pneg %p50
        %p143 = pneg %p47
        %p144 = pneg %p78
        %p145 = pneg %p75
        %s146 = smul.u32 4, %s20
        %p147 = scmp.lt.s32.totalorder %s19, 1
        %s148 = scalar_select %p147, %s19, 1
        %p149 = scmp.lt.s32.totalorder %s146, 3
        %s150 = scalar_select %p149, %s146, 3
        %s151 = smul.addr %s150, 4
        %s152 = smul.addr %s148, 16
        %s153 = sadd.s32 %s151, %s152
        %s154 = smul.addr %s153, 8
        %s155 = scalar_lea.vmem %s1, %s154
        %s156 = smul.u32 4, %s20
        %s157 = smul.u32 4, %s20
        %p158 = scmp.lt.s32.totalorder %s19, 1
        %s159 = scalar_select %p158, %s19, 1
        %p160 = scmp.lt.s32.totalorder %s157, 3
        %s161 = scalar_select %p160, %s157, 3
        %s162 = smul.addr %s161, 4
        %s163 = smul.addr %s159, 16
        %s164 = sadd.s32 %s162, %s163
        %s165 = smul.addr %s164, 8
        %s166 = scalar_lea.vmem %s1, %s165
        %s167 = smul.u32 4, %s20
        %vm168 = vcmask 226304
        %169 = vst.msk [vmem:[%s166] sm:$0x3f] %vm168, 0.0
        %170 = vst.msk [vmem:[%s166 + $0x20] sm:$0x3f] %vm168, 0.0
        %171 = vst.msk [vmem:[%s166 + $0x40] sm:$0x3f] %vm168, 0.0
        %172 = vst.msk [vmem:[%s166 + $0x60] sm:$0x3f] %vm168, 0.0
        %173 = vst.msk [vmem:[%s166 + $0x16] sm:$0x3f] %vm168, 0.0
        %174 = vst.msk [vmem:[%s166 + $0x36] sm:$0x3f] %vm168, 0.0
        %175 = vst.msk [vmem:[%s166 + $0x56] sm:$0x3f] %vm168, 0.0
        %176 = vst.msk [vmem:[%s166 + $0x76] sm:$0x3f] %vm168, 0.0
        %vm177 = vcmask 228352
        %178 = vst.msk [vmem:[%s166 + $0x6] sm:$0xff] %vm177, 0.0
        %179 = vst.msk [vmem:[%s166 + $0xe] sm:$0xff] %vm177, 0.0
        %180 = vst.msk [vmem:[%s166 + $0x26] sm:$0xff] %vm177, 0.0
        %181 = vst.msk [vmem:[%s166 + $0x2e] sm:$0xff] %vm177, 0.0
        %182 = vst.msk [vmem:[%s166 + $0x46] sm:$0xff] %vm177, 0.0
        %183 = vst.msk [vmem:[%s166 + $0x4e] sm:$0xff] %vm177, 0.0
        %184 = vst.msk [vmem:[%s166 + $0x66] sm:$0xff] %vm177, 0.0
        %185 = vst.msk [vmem:[%s166 + $0x6e] sm:$0xff] %vm177, 0.0
        %v186 = vld [vmem:[%s132] sm:$0xff]
        %v187 = vld [vmem:[%s132 + $0x8] sm:$0xff]
        %v188 = vld [vmem:[%s132 + $0x10] sm:$0xff]
        %v189 = vld [vmem:[%s132 + $0x18] sm:$0xff]
        %v190 = vld [vmem:[%s132 + $0x20] sm:$0xff]
        %v191 = vld [vmem:[%s132 + $0x28] sm:$0xff]
        %v192 = vld [vmem:[%s132 + $0x30] sm:$0xff]
        %v193 = vld [vmem:[%s132 + $0x38] sm:$0xff]
        %202 = vrot.lane.b32.xlu0 %v186, 6
        %v203 = vpop.permute.xlu0 %202
        %204 = vrot.lane.b32.xlu0 %v187, 6
        %v205 = vpop.permute.xlu0 %204
        %206 = vrot.lane.b32.xlu0 %v188, 6
        %v207 = vpop.permute.xlu0 %206
        %208 = vrot.lane.b32.xlu0 %v189, 6
        %v209 = vpop.permute.xlu0 %208
        %210 = vrot.lane.b32.xlu0 %v190, 6
        %v211 = vpop.permute.xlu0 %210
        %212 = vrot.lane.b32.xlu0 %v191, 6
        %v213 = vpop.permute.xlu0 %212
        %214 = vrot.lane.b32.xlu0 %v192, 6
        %v215 = vpop.permute.xlu0 %214
        %216 = vrot.lane.b32.xlu0 %v193, 6
        %v217 = vpop.permute.xlu0 %216
        %vm226 = vcmask 179248
        %227 = vst.msk [vmem:[%s166 + $0x6] sm:$0xff] %vm226, %v203
        %228 = vst.msk [vmem:[%s166 + $0xe] sm:$0xff] %vm226, %v205
        %229 = vst.msk [vmem:[%s166 + $0x26] sm:$0xff] %vm226, %v207
        %230 = vst.msk [vmem:[%s166 + $0x2e] sm:$0xff] %vm226, %v209
        %231 = vst.msk [vmem:[%s166 + $0x46] sm:$0xff] %vm226, %v211
        %232 = vst.msk [vmem:[%s166 + $0x4e] sm:$0xff] %vm226, %v213
        %233 = vst.msk [vmem:[%s166 + $0x66] sm:$0xff] %vm226, %v215
        %234 = vst.msk [vmem:[%s166 + $0x6e] sm:$0xff] %vm226, %v217
        %s235 = smul.u32 4, %s20
        %p236 = scmp.lt.s32.totalorder %s19, 1
        %s237 = scalar_select %p236, %s19, 1
        %p238 = scmp.lt.s32.totalorder %s235, 3
        %s239 = scalar_select %p238, %s235, 3
        %s240 = smul.addr %s239, 4
        %s241 = smul.addr %s237, 16
        %s242 = sadd.s32 %s240, %s241
        %s243 = smul.addr %s242, 8
        %s244 = scalar_lea.vmem %s1, %s243
        // Predicated region
        $region29: #{tpu_custom_call.1} parent=23 // pred_check
          %p245 = pneg %p75
        $region30: #{tpu_custom_call.1} parent=23 // pred_check_branch
          %247 = sbr.rel (%p245) target = $region32
        $region31: #{tpu_custom_call.1} parent=23 // pred_region
          %s248 = smul.u32 4, %s20
        $region32: #{tpu_custom_call.1} parent=23 // pred_fallthru
          _
      $region24: #{tpu_custom_call.1} parent=5 // pred_fallthru
        _
      %p249 = scmp.le.s32.totalorder 2, %s10
      // Predicated region
      $region33: #{tpu_custom_call.1} parent=5 // pred_check
        %p250 = pneg %p249
      $region34: #{tpu_custom_call.1} parent=5 // pred_check_branch
        %252 = sbr.rel (%p250) target = $region36
      $region35: #{tpu_custom_call.1} parent=5 // pred_region
        %s253 = ssub.s32 %s10, 2
        // Predicated region
        $region37: #{tpu_custom_call.1} parent=35 // pred_check
          %p254 = pneg %p81
        $region38: #{tpu_custom_call.1} parent=35 // pred_check_branch
          %256 = sbr.rel (%p254) target = $region40
        $region39: #{tpu_custom_call.1} parent=35 // pred_region
          %s257 = smul.u32 4, %s22
          %p258 = scmp.lt.s32.totalorder %s21, 1
          %s259 = scalar_select %p258, %s21, 1
          %p260 = scmp.lt.s32.totalorder %s257, 3
          %s261 = scalar_select %p260, %s257, 3
          %s262 = smul.addr %s261, 4
          %s263 = smul.addr %s259, 16
          %s264 = sadd.s32 %s262, %s263
          %s265 = smul.addr %s264, 8
          %s266 = scalar_lea.vmem %s1, %s265
        $region40: #{tpu_custom_call.1} parent=35 // pred_fallthru
          _
      $region36: #{tpu_custom_call.1} parent=5 // pred_fallthru
        _
    $region6: #{tpu_custom_call.1} parent=1 // loop_footer
      %s14 = sadd.s32 1, %s10
    $region7: #{tpu_custom_call.1} parent=1 // loop_footer_branch
      %9 = sbr.rel target = $region3
    $region8: #{tpu_custom_call.1} parent=1 // loop_exit
      _
    %267 = vsyncpa [#allocation3], 1
    %s268 = scalar_lea.sflag [#allocation3], 1
    %269 = vsyncpa %s268, 1

</llo_original>
